<compile_context>
chip_gen: v7x
topology: tpu7x:2x2x1
jax: 0.10.0
libtpu: 0.0.40
codegen_flags: <defaults>
</compile_context>

<pallas_src>
import functools

import jax
import jax.numpy as jnp
from jax.experimental import pallas as pl
from jax.experimental.pallas import tpu as pltpu


def _round_up(a, m):
    return ((a + m - 1) // m) * m


def _vmem_budget():
    """Returns (target block bytes, scoped vmem_limit_bytes) for the local TPU."""
    cap = 32 << 20  # conservative fallback if the hardware query fails
    try:
        cap = int(getattr(pltpu.get_tpu_info(), "vmem_capacity_bytes", cap))
    except Exception:
        pass
    if cap <= (64 << 20):
        # v7x-class (64 MiB per TensorCore) or smaller: leave headroom for the
        # double-buffered in/out blocks plus f32 temporaries.
        return max(1 << 20, min(4 << 20, cap // 16)), min(cap * 3 // 4, 48 << 20)
    # v5e / v6e: 128 MiB physical VMEM -> larger blocks, raised scoped limit.
    return 6 << 20, 80 << 20


def _rmsnorm_flat_kernel(x_ref, s_ref, seg_ref, segt_ref, o_ref, *, eps, inv_sqrt_w):
    # x_ref / o_ref: (bc, H*W) lane-dense.  s_ref: (bc, 1) per-(n,c) scale.
    # seg_ref: (H*W, H) block-diagonal 0/1, segt_ref: its transpose.
    x = x_ref[...].astype(jnp.float32)
    # Per-(row, h) sum of squares as a segmented reduce on the MXU.
    sumsq = jnp.dot(x * x, seg_ref[...],
                    preferred_element_type=jnp.float32,
                    precision=jax.lax.Precision.HIGHEST)            # (bc, H)
    rms = jnp.sqrt(sumsq) * inv_sqrt_w
    factor = s_ref[...] / (rms + eps)                                 # (bc, H)
    # Broadcast the per-(row, h) factor back to (bc, H*W) on the MXU.
    factor_full = jnp.dot(factor, segt_ref[...],
                          preferred_element_type=jnp.float32,
                          precision=jax.lax.Precision.HIGHEST)        # (bc, H*W)
    # Re-read x so the f32 copy above is not kept live across the reduction.
    o_ref[...] = (x_ref[...].astype(jnp.float32) * factor_full).astype(o_ref.dtype)


def _rmsnorm_nhw_kernel(x_ref, s_ref, o_ref, *, eps, inv_sqrt_w):
    # x_ref / o_ref: (bc, th, W).  s_ref: (bc, 1, 1).
    x = x_ref[...].astype(jnp.float32)
    sumsq = jnp.sum(x * x, axis=-1, keepdims=True)                    # (bc, th, 1)
    rms = jnp.sqrt(sumsq) * inv_sqrt_w
    factor = s_ref[...].astype(jnp.float32) / (rms + eps)             # (bc, th, 1)
    o_ref[...] = (x_ref[...].astype(jnp.float32) * factor).astype(o_ref.dtype)


def rmsnorm_pallas(x, scale, eps=1e-8):
    """x: (N, C, H, W); scale: (C,).  Returns (N, C, H, W), same dtype as x."""
    N, C, H, W = x.shape
    assert scale.shape == (C,), "scale must have shape (C,) = (x.shape[1],)"
    NC = N * C
    hw = H * W
    itemsize = x.dtype.itemsize
    target_bytes, vmem_limit = _vmem_budget()

    s_flat = jnp.tile(scale.astype(jnp.float32), N)   # (NC,) per-(n, c) scale
    inv_sqrt_w = 1.0 / (W ** 0.5)

    total = NC * hw
    cost = pl.CostEstimate(
        flops=8 * total,
        transcendentals=2 * NC * H,
        bytes_accessed=2 * total * itemsize + NC * 4,
    )

    seg_bytes = 2 * hw * H * 4
    use_flat = (W % 128 != 0) and seg_bytes <= (2 << 20) and 8 * hw * itemsize <= target_bytes

    if use_flat:
        # ---- Lane-dense path (W not a multiple of 128) -----------------------
        x2 = x.reshape(NC, hw)
        plane_bytes = hw * itemsize
        bc = min(max(8, (target_bytes // plane_bytes) // 8 * 8), _round_up(NC, 8))
        # v7x shares the grid over 2 TensorCores: prefer >= 8 steps (>= 4 per
        # core) as long as blocks stay reasonably large (>= ~256 KiB).
        bc_small = max(8, _round_up(pl.cdiv(NC, 8), 8))
        if bc_small * plane_bytes >= (256 << 10):
            bc = min(bc, bc_small)
        grid = (pl.cdiv(NC, bc),)
        nc_pad = grid[0] * bc

        s_col = jnp.concatenate(
            [s_flat, jnp.ones((nc_pad - NC,), jnp.float32)]).reshape(nc_pad, 1)
        row = jnp.arange(hw, dtype=jnp.int32)[:, None] // W        # (HW, 1)
        col = jnp.arange(H, dtype=jnp.int32)[None, :]              # (1, H)
        seg = (row == col).astype(jnp.float32)                     # (HW, H)
        segt = seg.T                                                # (H, HW)

        out2 = pl.pallas_call(
            functools.partial(_rmsnorm_flat_kernel,
                              eps=float(eps), inv_sqrt_w=inv_sqrt_w),
            out_shape=jax.ShapeDtypeStruct((NC, hw), x.dtype),
            grid_spec=pltpu.PrefetchScalarGridSpec(
                num_scalar_prefetch=0,
                grid=grid,
                in_specs=[
                    pl.BlockSpec((bc, hw), lambda i: (i, 0)),
                    pl.BlockSpec((bc, 1), lambda i: (i, 0)),
                    pl.BlockSpec((hw, H), lambda i: (0, 0)),   # constant index: resident
                    pl.BlockSpec((H, hw), lambda i: (0, 0)),
                ],
                out_specs=pl.BlockSpec((bc, hw), lambda i: (i, 0)),
            ),
            compiler_params=pltpu.CompilerParams(
                dimension_semantics=("parallel",),
                vmem_limit_bytes=vmem_limit),
            cost_estimate=cost,
        )(x2, s_col, seg, segt)
        return out2.reshape(N, C, H, W)

    # ---- Fallback path (W multiple of 128, or segment matrices too big) ------
    x3 = x.reshape(NC, H, W)
    plane_bytes = hw * itemsize
    if plane_bytes <= target_bytes:
        th, grid_h = H, 1
        bc = max(1, min(target_bytes // plane_bytes, NC))
        bc_small = max(1, pl.cdiv(NC, 8))
        if bc_small * plane_bytes >= (256 << 10):
            bc = min(bc, bc_small)
    else:
        # A single plane exceeds the budget: tile H (multiples of 8); the
        # reduction is only over W, so H-tiles are independent.
        bc = 1
        th = max(8, (target_bytes // (W * itemsize)) // 8 * 8)
        th = min(th, _round_up(H, 8))
        grid_h = pl.cdiv(H, th)
    grid = (pl.cdiv(NC, bc), grid_h)
    s3 = s_flat.reshape(NC, 1, 1)

    out3 = pl.pallas_call(
        functools.partial(_rmsnorm_nhw_kernel,
                          eps=float(eps), inv_sqrt_w=inv_sqrt_w),
        out_shape=jax.ShapeDtypeStruct((NC, H, W), x.dtype),
        grid_spec=pltpu.PrefetchScalarGridSpec(
            num_scalar_prefetch=0,
            grid=grid,
            in_specs=[
                pl.BlockSpec((bc, th, W), lambda i, j: (i, j, 0)),
                pl.BlockSpec((bc, 1, 1), lambda i, j: (i, 0, 0)),
            ],
            out_specs=pl.BlockSpec((bc, th, W), lambda i, j: (i, j, 0)),
        ),
        compiler_params=pltpu.CompilerParams(
            dimension_semantics=("parallel", "parallel"),
            vmem_limit_bytes=vmem_limit),
        cost_estimate=cost,
    )(x3, s3)
    return out3.reshape(N, C, H, W)


if __name__ == "__main__":
    # Small shapes consistent with the module: RMSNorm(d=C) on NCHW input.
    N, C, H, W = 2, 4, 16, 16
    eps = 1e-8

    key = jax.random.PRNGKey(0)
    kx, ks = jax.random.split(key)
    x = jax.random.normal(kx, (N, C, H, W), dtype=jnp.float32)
    # Module init is ones(d); use a perturbed scale to exercise the broadcast.
    scale = 1.0 + 0.1 * jax.random.normal(ks, (C,), dtype=jnp.float32)

    out = rmsnorm_pallas(x, scale, eps)
    out = jax.block_until_ready(out)

    # Pure-JAX reference mirroring rmsnorm_function exactly.
    norm = jnp.sqrt(jnp.sum(x * x, axis=-1, keepdims=True))
    rms = norm / (W ** 0.5)
    ref = scale[None, :, None, None] * x / (rms + eps)

    assert out.shape == (N, C, H, W)
    assert jnp.allclose(out, ref, atol=1e-4, rtol=1e-4)

    print("KERNEL_OK")
</pallas_src>

<mosaic_0001>
module attributes {stable_mosaic.version = 11 : i64} {
  func.func @_rmsnorm_flat_kernel(%arg0: i32, %arg1: memref<8x256xf32, #tpu.memory_space<vmem>>, %arg2: memref<8x1xf32, #tpu.memory_space<vmem>>, %arg3: memref<256x16xf32, #tpu.memory_space<vmem>>, %arg4: memref<16x256xf32, #tpu.memory_space<vmem>>, %arg5: memref<8x256xf32, #tpu.memory_space<vmem>>) attributes {dimension_semantics = [#tpu.dimension_semantics<parallel>], iteration_bounds = array<i64: 1>, scalar_prefetch = 0 : i64, scratch_operands = 0 : i64, tpu.core_type = #tpu.core_type<tc>, window_params = [{transform_indices = @transform_0, window_bounds = array<i64: 8, 256>}, {transform_indices = @transform_1, window_bounds = array<i64: 8, 1>}, {pipeline_mode = #tpu.pipeline_mode<synchronous>, transform_indices = @transform_2, window_bounds = array<i64: 256, 16>}, {pipeline_mode = #tpu.pipeline_mode<synchronous>, transform_indices = @transform_3, window_bounds = array<i64: 16, 256>}, {transform_indices = @transform_4, window_bounds = array<i64: 8, 256>}]} {
    %c0 = arith.constant 0 : index
    %c0_0 = arith.constant 0 : index
    %0 = vector.load %arg1[%c0, %c0_0] : memref<8x256xf32, #tpu.memory_space<vmem>>, vector<8x256xf32>
    %1 = arith.mulf %0, %0 : vector<8x256xf32>
    %c0_1 = arith.constant 0 : index
    %c0_2 = arith.constant 0 : index
    %2 = vector.load %arg3[%c0_1, %c0_2] : memref<256x16xf32, #tpu.memory_space<vmem>>, vector<256x16xf32>
    %cst = arith.constant dense<0.000000e+00> : vector<8x16xf32>
    %3 = tpu.matmul %1, %2, %cst {dimension_numbers = #tpu.dot_dimension_numbers<[1], [0], [0], [1], [0, 0, 1, 1], [], []>, precision = #tpu.contract_precision<fp32>} : vector<8x256xf32>, vector<256x16xf32>, vector<8x16xf32> -> vector<8x16xf32>
    %4 = math.sqrt %3 : vector<8x16xf32>
    %cst_3 = arith.constant 2.500000e-01 : f32
    %5 = vector.broadcast %cst_3 : f32 to vector<8x16xf32>
    %6 = arith.mulf %4, %5 : vector<8x16xf32>
    %c0_4 = arith.constant 0 : index
    %c0_5 = arith.constant 0 : index
    %7 = vector.load %arg2[%c0_4, %c0_5] : memref<8x1xf32, #tpu.memory_space<vmem>>, vector<8x1xf32>
    %cst_6 = arith.constant 9.99999993E-9 : f32
    %8 = vector.broadcast %cst_6 : f32 to vector<8x16xf32>
    %9 = arith.addf %6, %8 : vector<8x16xf32>
    %10 = vector.broadcast %7 : vector<8x1xf32> to vector<8x16xf32>
    %11 = arith.divf %10, %9 : vector<8x16xf32>
    %c0_7 = arith.constant 0 : index
    %c0_8 = arith.constant 0 : index
    %12 = vector.load %arg4[%c0_7, %c0_8] : memref<16x256xf32, #tpu.memory_space<vmem>>, vector<16x256xf32>
    %cst_9 = arith.constant dense<0.000000e+00> : vector<8x256xf32>
    %13 = tpu.matmul %11, %12, %cst_9 {dimension_numbers = #tpu.dot_dimension_numbers<[1], [0], [0], [1], [0, 0, 1, 1], [], []>, precision = #tpu.contract_precision<fp32>} : vector<8x16xf32>, vector<16x256xf32>, vector<8x256xf32> -> vector<8x256xf32>
    %c0_10 = arith.constant 0 : index
    %c0_11 = arith.constant 0 : index
    %14 = vector.load %arg1[%c0_10, %c0_11] : memref<8x256xf32, #tpu.memory_space<vmem>>, vector<8x256xf32>
    %15 = arith.mulf %14, %13 : vector<8x256xf32>
    %c0_12 = arith.constant 0 : index
    %c0_13 = arith.constant 0 : index
    %16 = vector.load %arg5[%c0_12, %c0_13] : memref<8x256xf32, #tpu.memory_space<vmem>>, vector<8x256xf32>
    tpu.vector_store %arg5[%c0_12, %c0_13], %15 {strides = array<i32>} : memref<8x256xf32, #tpu.memory_space<vmem>>, vector<8x256xf32>,
    return
  }
  func.func @transform_0(%arg0: i32) -> (i32, i32) {
    %c0_i32 = arith.constant 0 : i32
    %c0_i32_0 = arith.constant 0 : i32
    return %arg0, %c0_i32 : i32, i32
  }
  func.func @transform_1(%arg0: i32) -> (i32, i32) {
    %c0_i32 = arith.constant 0 : i32
    %c0_i32_0 = arith.constant 0 : i32
    return %arg0, %c0_i32 : i32, i32
  }
  func.func @transform_2(%arg0: i32) -> (i32, i32) {
    %c0_i32 = arith.constant 0 : i32
    %c0_i32_0 = arith.constant 0 : i32
    %c0_i32_1 = arith.constant 0 : i32
    return %c0_i32, %c0_i32_0 : i32, i32
  }
  func.func @transform_3(%arg0: i32) -> (i32, i32) {
    %c0_i32 = arith.constant 0 : i32
    %c0_i32_0 = arith.constant 0 : i32
    %c0_i32_1 = arith.constant 0 : i32
    return %c0_i32, %c0_i32_0 : i32, i32
  }
  func.func @transform_4(%arg0: i32) -> (i32, i32) {
    %c0_i32 = arith.constant 0 : i32
    %c0_i32_0 = arith.constant 0 : i32
    return %arg0, %c0_i32 : i32, i32
  }
}

</mosaic_0001>

<llo_original>
// kernel: tpu_custom_call.1
$region0: #{tpu_custom_call.1}
  #allocation0 [shape = 'u32[]', space=smem, size = 0x4, offset = 0x4, fixed_abs, tag = 'smem constant byte address 0x4 - core index']
  #allocation1 [shape = 'u32[144,128]{1,0:T(1,128)}', space=vmem, size = 0x12000, scoped, tag = 'internal scratch']
  %s0 = inlined_call_operand.vmem [shape: f32[8,256], index: 0, kind: input, shape index: {}]
  %s1 = inlined_call_operand.vmem [shape: f32[8,1], index: 1, kind: input, shape index: {}]
  %s2 = inlined_call_operand.vmem [shape: f32[256,16], index: 2, kind: input, shape index: {}]
  %s3 = inlined_call_operand.vmem [shape: f32[16,256], index: 3, kind: input, shape index: {}]
  %s4 = inlined_call_operand.hbm [shape: f32[8,256], index: 4, kind: output, shape index: {}]
  %s5 = sld [smem:[#allocation0]]
  $region26: #{tpu_custom_call.1} parent=0
    _
  %s7 = ssub.s32 1, %s5
  %s8 = scalar_select 0, %s7, %s5
  $region1: #{tpu_custom_call.1} parent=0
    #allocation2 [shape = 'u8[8192]{0}', space=vmem, size = 0x2000, scoped, tag = 'output window, operand 0, single buffered']
    #allocation3 [shape = 's32[1]{0}', space=sflag, size = 0x4, scoped, tag = 'scoped memory for tpu_custom_call.1']
    %9 = vsyncpa [#allocation3], 0
    // Predicated region
    $region2: #{tpu_custom_call.1} parent=1 // pred_check
      _
    $region3: #{tpu_custom_call.1} parent=1 // pred_check_branch
      %11 = sbr.rel (0) target = $region5
    $region4: #{tpu_custom_call.1} parent=1 // pred_region
      _
    $region5: #{tpu_custom_call.1} parent=1 // pred_fallthru
      _
    // Predicated region
    $region6: #{tpu_custom_call.1} parent=1 // pred_check
      _
    $region7: #{tpu_custom_call.1} parent=1 // pred_check_branch
      %13 = sbr.rel (0) target = $region9
    $region8: #{tpu_custom_call.1} parent=1 // pred_region
      _
    $region9: #{tpu_custom_call.1} parent=1 // pred_fallthru
      _
    // Predicated region
    $region10: #{tpu_custom_call.1} parent=1 // pred_check
      _
    $region11: #{tpu_custom_call.1} parent=1 // pred_check_branch
      %15 = sbr.rel (0) target = $region13
    $region12: #{tpu_custom_call.1} parent=1 // pred_region
      _
    $region13: #{tpu_custom_call.1} parent=1 // pred_fallthru
      _
    // Predicated region
    $region14: #{tpu_custom_call.1} parent=1 // pred_check
      _
    $region15: #{tpu_custom_call.1} parent=1 // pred_check_branch
      %17 = sbr.rel (0) target = $region17
    $region16: #{tpu_custom_call.1} parent=1 // pred_region
      _
    $region17: #{tpu_custom_call.1} parent=1 // pred_fallthru
      _
    %v18 = vld [vmem:[%s0] sm:$0xff]
    %v19 = vld [vmem:[%s0 + $0x8] sm:$0xff]
    %v20 = vmul.f32 %v18, %v18
    %v21 = vmul.f32 %v19, %v19
    %v22 = vld [vmem:[%s2] sm:$0xff]
    %v23 = vld [vmem:[%s2 + $0x8] sm:$0xff]
    %v24 = vld [vmem:[%s2 + $0x10] sm:$0xff]
    %v25 = vld [vmem:[%s2 + $0x18] sm:$0xff]
    %v26 = vld [vmem:[%s2 + $0x20] sm:$0xff]
    %v27 = vld [vmem:[%s2 + $0x28] sm:$0xff]
    %v28 = vld [vmem:[%s2 + $0x30] sm:$0xff]
    %v29 = vld [vmem:[%s2 + $0x38] sm:$0xff]
    %v30 = vld [vmem:[%s2 + $0x40] sm:$0xff]
    %v31 = vld [vmem:[%s2 + $0x48] sm:$0xff]
    %v32 = vld [vmem:[%s2 + $0x50] sm:$0xff]
    %v33 = vld [vmem:[%s2 + $0x58] sm:$0xff]
    %v34 = vld [vmem:[%s2 + $0x60] sm:$0xff]
    %v35 = vld [vmem:[%s2 + $0x68] sm:$0xff]
    %v36 = vld [vmem:[%s2 + $0x70] sm:$0xff]
    %v37 = vld [vmem:[%s2 + $0x78] sm:$0xff]
    %v38 = vld [vmem:[%s2 + $0x80] sm:$0xff]
    %v39 = vld [vmem:[%s2 + $0x88] sm:$0xff]
    %v40 = vld [vmem:[%s2 + $0x90] sm:$0xff]
    %v41 = vld [vmem:[%s2 + $0x98] sm:$0xff]
    %v42 = vld [vmem:[%s2 + $0xa0] sm:$0xff]
    %v43 = vld [vmem:[%s2 + $0xa8] sm:$0xff]
    %v44 = vld [vmem:[%s2 + $0xb0] sm:$0xff]
    %v45 = vld [vmem:[%s2 + $0xb8] sm:$0xff]
    %v46 = vld [vmem:[%s2 + $0xc0] sm:$0xff]
    %v47 = vld [vmem:[%s2 + $0xc8] sm:$0xff]
    %v48 = vld [vmem:[%s2 + $0xd0] sm:$0xff]
    %v49 = vld [vmem:[%s2 + $0xd8] sm:$0xff]
    %v50 = vld [vmem:[%s2 + $0xe0] sm:$0xff]
    %v51 = vld [vmem:[%s2 + $0xe8] sm:$0xff]
    %v52 = vld [vmem:[%s2 + $0xf0] sm:$0xff]
    %v53 = vld [vmem:[%s2 + $0xf8] sm:$0xff]
    %54 = vmatprep.subr.mxu0 0.0
    %v55 = vand.u32 %v22, 4294901760
    %56 = vmatpush1.msra.mxu0 %v55
    %57 = vmatprep.subr.mxu0 0.0
    %v58 = vand.u32 %v23, 4294901760
    %59 = vmatpush1.msra.mxu0 %v58
    %60 = vmatprep.subr.mxu0 0.0
    %v61 = vand.u32 %v24, 4294901760
    %62 = vmatpush1.msra.mxu0 %v61
    %63 = vmatprep.subr.mxu0 0.0
    %v64 = vand.u32 %v25, 4294901760
    %65 = vmatpush1.msra.mxu0 %v64
    %66 = vmatprep.subr.mxu0 0.0
    %v67 = vand.u32 %v26, 4294901760
    %68 = vmatpush1.msra.mxu0 %v67
    %69 = vmatprep.subr.mxu0 0.0
    %v70 = vand.u32 %v27, 4294901760
    %71 = vmatpush1.msra.mxu0 %v70
    %72 = vmatprep.subr.mxu0 0.0
    %v73 = vand.u32 %v28, 4294901760
    %74 = vmatpush1.msra.mxu0 %v73
    %75 = vmatprep.subr.mxu0 0.0
    %v76 = vand.u32 %v29, 4294901760
    %77 = vmatpush1.msra.mxu0 %v76
    %78 = vmatprep.subr.mxu0 0.0
    %v79 = vand.u32 %v30, 4294901760
    %80 = vmatpush1.msra.mxu0 %v79
    %81 = vmatprep.subr.mxu0 0.0
    %v82 = vand.u32 %v31, 4294901760
    %83 = vmatpush1.msra.mxu0 %v82
    %84 = vmatprep.subr.mxu0 0.0
    %v85 = vand.u32 %v32, 4294901760
    %86 = vmatpush1.msra.mxu0 %v85
    %87 = vmatprep.subr.mxu0 0.0
    %v88 = vand.u32 %v33, 4294901760
    %89 = vmatpush1.msra.mxu0 %v88
    %90 = vmatprep.subr.mxu0 0.0
    %v91 = vand.u32 %v34, 4294901760
    %92 = vmatpush1.msra.mxu0 %v91
    %93 = vmatprep.subr.mxu0 0.0
    %v94 = vand.u32 %v35, 4294901760
    %95 = vmatpush1.msra.mxu0 %v94
    %96 = vmatprep.subr.mxu0 0.0
    %v97 = vand.u32 %v36, 4294901760
    %98 = vmatpush1.msra.mxu0 %v97
    %99 = vmatprep.subr.mxu0 0.0
    %v100 = vand.u32 %v37, 4294901760
    %101 = vmatpush1.msra.mxu0 %v100
    %102 = vmatprep.subr.mxu0 0.0
    %v103 = vand.u32 %v38, 4294901760
    %104 = vmatpush1.msra.mxu0 %v103
    %105 = vmatprep.subr.mxu0 0.0
    %v106 = vand.u32 %v39, 4294901760
    %107 = vmatpush1.msra.mxu0 %v106
    %108 = vmatprep.subr.mxu0 0.0
    %v109 = vand.u32 %v40, 4294901760
    %110 = vmatpush1.msra.mxu0 %v109
    %111 = vmatprep.subr.mxu0 0.0
    %v112 = vand.u32 %v41, 4294901760
    %113 = vmatpush1.msra.mxu0 %v112
    %114 = vmatprep.subr.mxu0 0.0
    %v115 = vand.u32 %v42, 4294901760
    %116 = vmatpush1.msra.mxu0 %v115
    %117 = vmatprep.subr.mxu0 0.0
    %v118 = vand.u32 %v43, 4294901760
    %119 = vmatpush1.msra.mxu0 %v118
    %120 = vmatprep.subr.mxu0 0.0
    %v121 = vand.u32 %v44, 4294901760
    %122 = vmatpush1.msra.mxu0 %v121
    %123 = vmatprep.subr.mxu0 0.0
    %v124 = vand.u32 %v45, 4294901760
    %125 = vmatpush1.msra.mxu0 %v124
    %126 = vmatprep.subr.mxu0 0.0
    %v127 = vand.u32 %v46, 4294901760
    %128 = vmatpush1.msra.mxu0 %v127
    %129 = vmatprep.subr.mxu0 0.0
    %v130 = vand.u32 %v47, 4294901760
    %131 = vmatpush1.msra.mxu0 %v130
    %132 = vmatprep.subr.mxu0 0.0
    %v133 = vand.u32 %v48, 4294901760
    %134 = vmatpush1.msra.mxu0 %v133
    %135 = vmatprep.subr.mxu0 0.0
    %v136 = vand.u32 %v49, 4294901760
    %137 = vmatpush1.msra.mxu0 %v136
    %138 = vmatprep.subr.mxu0 0.0
    %v139 = vand.u32 %v50, 4294901760
    %140 = vmatpush1.msra.mxu0 %v139
    %141 = vmatprep.subr.mxu0 0.0
    %v142 = vand.u32 %v51, 4294901760
    %143 = vmatpush1.msra.mxu0 %v142
    %144 = vmatprep.subr.mxu0 0.0
    %v145 = vand.u32 %v52, 4294901760
    %146 = vmatpush1.msra.mxu0 %v145
    %147 = vmatprep.subr.mxu0 0.0
    %v148 = vand.u32 %v53, 4294901760
    %149 = vmatpush1.msra.mxu0 %v148
    %v150 = vand.u32 %v21, 4294901760
    %v151 = vsub.f32 %v21, %v150
    %v152 = vand.u32 %v151, 4294901760
    %v153 = vsub.f32 %v151, %v152
    %v154 = vand.u32 %v153, 4294901760
    %155 = vmatprep.mubr.f32.mxu0 %v154
    %v156 = vand.u32 %v20, 4294901760
    %v157 = vsub.f32 %v20, %v156
    %v158 = vand.u32 %v157, 4294901760
    %v159 = vsub.f32 %v157, %v158
    %v160 = vand.u32 %v159, 4294901760
    %161 = vmatmul.mubr.f32.gmra.mrb[0].mxu0 %v160
    %v162 = vpop.f32.mrb[0].mxu0
    %v163 = vadd.f32 0.0, %v162
    %v164 = vpop.f32.mrb[0].mxu0
    %165 = vdwg.mxu0
    %166 = vmatprep.subr.mxu0 0.0
    %v167 = vand.u32 %v22, 4294901760
    %v168 = vsub.f32 %v22, %v167
    %v169 = vand.u32 %v168, 4294901760
    %v170 = vsub.f32 %v168, %v169
    %v171 = vand.u32 %v170, 4294901760
    %172 = vmatpush1.msra.mxu0 %v171
    %173 = vmatprep.subr.mxu0 0.0
    %v174 = vand.u32 %v23, 4294901760
    %v175 = vsub.f32 %v23, %v174
    %v176 = vand.u32 %v175, 4294901760
    %v177 = vsub.f32 %v175, %v176
    %v178 = vand.u32 %v177, 4294901760
    %179 = vmatpush1.msra.mxu0 %v178
    %180 = vmatprep.subr.mxu0 0.0
    %v181 = vand.u32 %v24, 4294901760
    %v182 = vsub.f32 %v24, %v181
    %v183 = vand.u32 %v182, 4294901760
    %v184 = vsub.f32 %v182, %v183
    %v185 = vand.u32 %v184, 4294901760
    %186 = vmatpush1.msra.mxu0 %v185
    %187 = vmatprep.subr.mxu0 0.0
    %v188 = vand.u32 %v25, 4294901760
    %v189 = vsub.f32 %v25, %v188
    %v190 = vand.u32 %v189, 4294901760
    %v191 = vsub.f32 %v189, %v190
    %v192 = vand.u32 %v191, 4294901760
    %193 = vmatpush1.msra.mxu0 %v192
    %194 = vmatprep.subr.mxu0 0.0
    %v195 = vand.u32 %v26, 4294901760
    %v196 = vsub.f32 %v26, %v195
    %v197 = vand.u32 %v196, 4294901760
    %v198 = vsub.f32 %v196, %v197
    %v199 = vand.u32 %v198, 4294901760
    %200 = vmatpush1.msra.mxu0 %v199
    %201 = vmatprep.subr.mxu0 0.0
    %v202 = vand.u32 %v27, 4294901760
    %v203 = vsub.f32 %v27, %v202
    %v204 = vand.u32 %v203, 4294901760
    %v205 = vsub.f32 %v203, %v204
    %v206 = vand.u32 %v205, 4294901760
    %207 = vmatpush1.msra.mxu0 %v206
    %208 = vmatprep.subr.mxu0 0.0
    %v209 = vand.u32 %v28, 4294901760
    %v210 = vsub.f32 %v28, %v209
    %v211 = vand.u32 %v210, 4294901760
    %v212 = vsub.f32 %v210, %v211
    %v213 = vand.u32 %v212, 4294901760
    %214 = vmatpush1.msra.mxu0 %v213
    %215 = vmatprep.subr.mxu0 0.0
    %v216 = vand.u32 %v29, 4294901760
    %v217 = vsub.f32 %v29, %v216
    %v218 = vand.u32 %v217, 4294901760
    %v219 = vsub.f32 %v217, %v218
    %v220 = vand.u32 %v219, 4294901760
    %221 = vmatpush1.msra.mxu0 %v220
    %222 = vmatprep.subr.mxu0 0.0
    %v223 = vand.u32 %v30, 4294901760
    %v224 = vsub.f32 %v30, %v223
    %v225 = vand.u32 %v224, 4294901760
    %v226 = vsub.f32 %v224, %v225
    %v227 = vand.u32 %v226, 4294901760
    %228 = vmatpush1.msra.mxu0 %v227
    %229 = vmatprep.subr.mxu0 0.0
    %v230 = vand.u32 %v31, 4294901760
    %v231 = vsub.f32 %v31, %v230
    %v232 = vand.u32 %v231, 4294901760
    %v233 = vsub.f32 %v231, %v232
    %v234 = vand.u32 %v233, 4294901760
    %235 = vmatpush1.msra.mxu0 %v234
    %236 = vmatprep.subr.mxu0 0.0
    %v237 = vand.u32 %v32, 4294901760
    %v238 = vsub.f32 %v32, %v237
    %v239 = vand.u32 %v238, 4294901760
    %v240 = vsub.f32 %v238, %v239
    %v241 = vand.u32 %v240, 4294901760
    %242 = vmatpush1.msra.mxu0 %v241
    %243 = vmatprep.subr.mxu0 0.0
    %v244 = vand.u32 %v33, 4294901760
    %v245 = vsub.f32 %v33, %v244
    %v246 = vand.u32 %v245, 4294901760
    %v247 = vsub.f32 %v245, %v246
    %v248 = vand.u32 %v247, 4294901760
    %249 = vmatpush1.msra.mxu0 %v248
    %250 = vmatprep.subr.mxu0 0.0
    %v251 = vand.u32 %v34, 4294901760
    %v252 = vsub.f32 %v34, %v251
    %v253 = vand.u32 %v252, 4294901760
    %v254 = vsub.f32 %v252, %v253
    %v255 = vand.u32 %v254, 4294901760
    %256 = vmatpush1.msra.mxu0 %v255
    %257 = vmatprep.subr.mxu0 0.0
    %v258 = vand.u32 %v35, 4294901760
    %v259 = vsub.f32 %v35, %v258
    %v260 = vand.u32 %v259, 4294901760
    %v261 = vsub.f32 %v259, %v260
    %v262 = vand.u32 %v261, 4294901760
    %263 = vmatpush1.msra.mxu0 %v262
    %264 = vmatprep.subr.mxu0 0.0
    %v265 = vand.u32 %v36, 4294901760
    %v266 = vsub.f32 %v36, %v265
    %v267 = vand.u32 %v266, 4294901760
    %v268 = vsub.f32 %v266, %v267
    %v269 = vand.u32 %v268, 4294901760
    %270 = vmatpush1.msra.mxu0 %v269
    %271 = vmatprep.subr.mxu0 0.0
    %v272 = vand.u32 %v37, 4294901760
    %v273 = vsub.f32 %v37, %v272
    %v274 = vand.u32 %v273, 4294901760
    %v275 = vsub.f32 %v273, %v274
    %v276 = vand.u32 %v275, 4294901760
    %277 = vmatpush1.msra.mxu0 %v276
    %278 = vmatprep.subr.mxu0 0.0
    %v279 = vand.u32 %v38, 4294901760
    %v280 = vsub.f32 %v38, %v279
    %v281 = vand.u32 %v280, 4294901760
    %v282 = vsub.f32 %v280, %v281
    %v283 = vand.u32 %v282, 4294901760
    %284 = vmatpush1.msra.mxu0 %v283
    %285 = vmatprep.subr.mxu0 0.0
    %v286 = vand.u32 %v39, 4294901760
    %v287 = vsub.f32 %v39, %v286
    %v288 = vand.u32 %v287, 4294901760
    %v289 = vsub.f32 %v287, %v288
    %v290 = vand.u32 %v289, 4294901760
    %291 = vmatpush1.msra.mxu0 %v290
    %292 = vmatprep.subr.mxu0 0.0
    %v293 = vand.u32 %v40, 4294901760
    %v294 = vsub.f32 %v40, %v293
    %v295 = vand.u32 %v294, 4294901760
    %v296 = vsub.f32 %v294, %v295
    %v297 = vand.u32 %v296, 4294901760
    %298 = vmatpush1.msra.mxu0 %v297
    %299 = vmatprep.subr.mxu0 0.0
    %v300 = vand.u32 %v41, 4294901760
    %v301 = vsub.f32 %v41, %v300
    %v302 = vand.u32 %v301, 4294901760
    %v303 = vsub.f32 %v301, %v302
    %v304 = vand.u32 %v303, 4294901760
    %305 = vmatpush1.msra.mxu0 %v304
    %306 = vmatprep.subr.mxu0 0.0
    %v307 = vand.u32 %v42, 4294901760
    %v308 = vsub.f32 %v42, %v307
    %v309 = vand.u32 %v308, 4294901760
    %v310 = vsub.f32 %v308, %v309
    %v311 = vand.u32 %v310, 4294901760
    %312 = vmatpush1.msra.mxu0 %v311
    %313 = vmatprep.subr.mxu0 0.0
    %v314 = vand.u32 %v43, 4294901760
    %v315 = vsub.f32 %v43, %v314
    %v316 = vand.u32 %v315, 4294901760
    %v317 = vsub.f32 %v315, %v316
    %v318 = vand.u32 %v317, 4294901760
    %319 = vmatpush1.msra.mxu0 %v318
    %320 = vmatprep.subr.mxu0 0.0
    %v321 = vand.u32 %v44, 4294901760
    %v322 = vsub.f32 %v44, %v321
    %v323 = vand.u32 %v322, 4294901760
    %v324 = vsub.f32 %v322, %v323
    %v325 = vand.u32 %v324, 4294901760
    %326 = vmatpush1.msra.mxu0 %v325
    %327 = vmatprep.subr.mxu0 0.0
    %v328 = vand.u32 %v45, 4294901760
    %v329 = vsub.f32 %v45, %v328
    %v330 = vand.u32 %v329, 4294901760
    %v331 = vsub.f32 %v329, %v330
    %v332 = vand.u32 %v331, 4294901760
    %333 = vmatpush1.msra.mxu0 %v332
    %334 = vmatprep.subr.mxu0 0.0
    %v335 = vand.u32 %v46, 4294901760
    %v336 = vsub.f32 %v46, %v335
    %v337 = vand.u32 %v336, 4294901760
    %v338 = vsub.f32 %v336, %v337
    %v339 = vand.u32 %v338, 4294901760
    %340 = vmatpush1.msra.mxu0 %v339
    %341 = vmatprep.subr.mxu0 0.0
    %v342 = vand.u32 %v47, 4294901760
    %v343 = vsub.f32 %v47, %v342
    %v344 = vand.u32 %v343, 4294901760
    %v345 = vsub.f32 %v343, %v344
    %v346 = vand.u32 %v345, 4294901760
    %347 = vmatpush1.msra.mxu0 %v346
    %348 = vmatprep.subr.mxu0 0.0
    %v349 = vand.u32 %v48, 4294901760
    %v350 = vsub.f32 %v48, %v349
    %v351 = vand.u32 %v350, 4294901760
    %v352 = vsub.f32 %v350, %v351
    %v353 = vand.u32 %v352, 4294901760
    %354 = vmatpush1.msra.mxu0 %v353
    %355 = vmatprep.subr.mxu0 0.0
    %v356 = vand.u32 %v49, 4294901760
    %v357 = vsub.f32 %v49, %v356
    %v358 = vand.u32 %v357, 4294901760
    %v359 = vsub.f32 %v357, %v358
    %v360 = vand.u32 %v359, 4294901760
    %361 = vmatpush1.msra.mxu0 %v360
    %362 = vmatprep.subr.mxu0 0.0
    %v363 = vand.u32 %v50, 4294901760
    %v364 = vsub.f32 %v50, %v363
    %v365 = vand.u32 %v364, 4294901760
    %v366 = vsub.f32 %v364, %v365
    %v367 = vand.u32 %v366, 4294901760
    %368 = vmatpush1.msra.mxu0 %v367
    %369 = vmatprep.subr.mxu0 0.0
    %v370 = vand.u32 %v51, 4294901760
    %v371 = vsub.f32 %v51, %v370
    %v372 = vand.u32 %v371, 4294901760
    %v373 = vsub.f32 %v371, %v372
    %v374 = vand.u32 %v373, 4294901760
    %375 = vmatpush1.msra.mxu0 %v374
    %376 = vmatprep.subr.mxu0 0.0
    %v377 = vand.u32 %v52, 4294901760
    %v378 = vsub.f32 %v52, %v377
    %v379 = vand.u32 %v378, 4294901760
    %v380 = vsub.f32 %v378, %v379
    %v381 = vand.u32 %v380, 4294901760
    %382 = vmatpush1.msra.mxu0 %v381
    %383 = vmatprep.subr.mxu0 0.0
    %v384 = vand.u32 %v53, 4294901760
    %v385 = vsub.f32 %v53, %v384
    %v386 = vand.u32 %v385, 4294901760
    %v387 = vsub.f32 %v385, %v386
    %v388 = vand.u32 %v387, 4294901760
    %389 = vmatpush1.msra.mxu0 %v388
    %v390 = vand.u32 %v21, 4294901760
    %391 = vmatprep.mubr.f32.mxu0 %v390
    %v392 = vand.u32 %v20, 4294901760
    %393 = vmatmul.mubr.f32.gmra.mrb[0].mxu0 %v392
    %v394 = vpop.f32.mrb[0].mxu0
    %v395 = vadd.f32 %v163, %v394
    %v396 = vpop.f32.mrb[0].mxu0
    %397 = vdwg.mxu0
    %398 = vmatprep.subr.mxu0 0.0
    %v399 = vand.u32 %v22, 4294901760
    %v400 = vsub.f32 %v22, %v399
    %401 = vmatpush1.msra.mxu0 %v400
    %402 = vmatprep.subr.mxu0 0.0
    %v403 = vand.u32 %v23, 4294901760
    %v404 = vsub.f32 %v23, %v403
    %405 = vmatpush1.msra.mxu0 %v404
    %406 = vmatprep.subr.mxu0 0.0
    %v407 = vand.u32 %v24, 4294901760
    %v408 = vsub.f32 %v24, %v407
    %409 = vmatpush1.msra.mxu0 %v408
    %410 = vmatprep.subr.mxu0 0.0
    %v411 = vand.u32 %v25, 4294901760
    %v412 = vsub.f32 %v25, %v411
    %413 = vmatpush1.msra.mxu0 %v412
    %414 = vmatprep.subr.mxu0 0.0
    %v415 = vand.u32 %v26, 4294901760
    %v416 = vsub.f32 %v26, %v415
    %417 = vmatpush1.msra.mxu0 %v416
    %418 = vmatprep.subr.mxu0 0.0
    %v419 = vand.u32 %v27, 4294901760
    %v420 = vsub.f32 %v27, %v419
    %421 = vmatpush1.msra.mxu0 %v420
    %422 = vmatprep.subr.mxu0 0.0
    %v423 = vand.u32 %v28, 4294901760
    %v424 = vsub.f32 %v28, %v423
    %425 = vmatpush1.msra.mxu0 %v424
    %426 = vmatprep.subr.mxu0 0.0
    %v427 = vand.u32 %v29, 4294901760
    %v428 = vsub.f32 %v29, %v427
    %429 = vmatpush1.msra.mxu0 %v428
    %430 = vmatprep.subr.mxu0 0.0
    %v431 = vand.u32 %v30, 4294901760
    %v432 = vsub.f32 %v30, %v431
    %433 = vmatpush1.msra.mxu0 %v432
    %434 = vmatprep.subr.mxu0 0.0
    %v435 = vand.u32 %v31, 4294901760
    %v436 = vsub.f32 %v31, %v435
    %437 = vmatpush1.msra.mxu0 %v436
    %438 = vmatprep.subr.mxu0 0.0
    %v439 = vand.u32 %v32, 4294901760
    %v440 = vsub.f32 %v32, %v439
    %441 = vmatpush1.msra.mxu0 %v440
    %442 = vmatprep.subr.mxu0 0.0
    %v443 = vand.u32 %v33, 4294901760
    %v444 = vsub.f32 %v33, %v443
    %445 = vmatpush1.msra.mxu0 %v444
    %446 = vmatprep.subr.mxu0 0.0
    %v447 = vand.u32 %v34, 4294901760
    %v448 = vsub.f32 %v34, %v447
    %449 = vmatpush1.msra.mxu0 %v448
    %450 = vmatprep.subr.mxu0 0.0
    %v451 = vand.u32 %v35, 4294901760
    %v452 = vsub.f32 %v35, %v451
    %453 = vmatpush1.msra.mxu0 %v452
    %454 = vmatprep.subr.mxu0 0.0
    %v455 = vand.u32 %v36, 4294901760
    %v456 = vsub.f32 %v36, %v455
    %457 = vmatpush1.msra.mxu0 %v456
    %458 = vmatprep.subr.mxu0 0.0
    %v459 = vand.u32 %v37, 4294901760
    %v460 = vsub.f32 %v37, %v459
    %461 = vmatpush1.msra.mxu0 %v460
    %462 = vmatprep.subr.mxu0 0.0
    %v463 = vand.u32 %v38, 4294901760
    %v464 = vsub.f32 %v38, %v463
    %465 = vmatpush1.msra.mxu0 %v464
    %466 = vmatprep.subr.mxu0 0.0
    %v467 = vand.u32 %v39, 4294901760
    %v468 = vsub.f32 %v39, %v467
    %469 = vmatpush1.msra.mxu0 %v468
    %470 = vmatprep.subr.mxu0 0.0
    %v471 = vand.u32 %v40, 4294901760
    %v472 = vsub.f32 %v40, %v471
    %473 = vmatpush1.msra.mxu0 %v472
    %474 = vmatprep.subr.mxu0 0.0
    %v475 = vand.u32 %v41, 4294901760
    %v476 = vsub.f32 %v41, %v475
    %477 = vmatpush1.msra.mxu0 %v476
    %478 = vmatprep.subr.mxu0 0.0
    %v479 = vand.u32 %v42, 4294901760
    %v480 = vsub.f32 %v42, %v479
    %481 = vmatpush1.msra.mxu0 %v480
    %482 = vmatprep.subr.mxu0 0.0
    %v483 = vand.u32 %v43, 4294901760
    %v484 = vsub.f32 %v43, %v483
    %485 = vmatpush1.msra.mxu0 %v484
    %486 = vmatprep.subr.mxu0 0.0
    %v487 = vand.u32 %v44, 4294901760
    %v488 = vsub.f32 %v44, %v487
    %489 = vmatpush1.msra.mxu0 %v488
    %490 = vmatprep.subr.mxu0 0.0
    %v491 = vand.u32 %v45, 4294901760
    %v492 = vsub.f32 %v45, %v491
    %493 = vmatpush1.msra.mxu0 %v492
    %494 = vmatprep.subr.mxu0 0.0
    %v495 = vand.u32 %v46, 4294901760
    %v496 = vsub.f32 %v46, %v495
    %497 = vmatpush1.msra.mxu0 %v496
    %498 = vmatprep.subr.mxu0 0.0
    %v499 = vand.u32 %v47, 4294901760
    %v500 = vsub.f32 %v47, %v499
    %501 = vmatpush1.msra.mxu0 %v500
    %502 = vmatprep.subr.mxu0 0.0
    %v503 = vand.u32 %v48, 4294901760
    %v504 = vsub.f32 %v48, %v503
    %505 = vmatpush1.msra.mxu0 %v504
    %506 = vmatprep.subr.mxu0 0.0
    %v507 = vand.u32 %v49, 4294901760
    %v508 = vsub.f32 %v49, %v507
    %509 = vmatpush1.msra.mxu0 %v508
    %510 = vmatprep.subr.mxu0 0.0
    %v511 = vand.u32 %v50, 4294901760
    %v512 = vsub.f32 %v50, %v511
    %513 = vmatpush1.msra.mxu0 %v512
    %514 = vmatprep.subr.mxu0 0.0
    %v515 = vand.u32 %v51, 4294901760
    %v516 = vsub.f32 %v51, %v515
    %517 = vmatpush1.msra.mxu0 %v516
    %518 = vmatprep.subr.mxu0 0.0
    %v519 = vand.u32 %v52, 4294901760
    %v520 = vsub.f32 %v52, %v519
    %521 = vmatpush1.msra.mxu0 %v520
    %522 = vmatprep.subr.mxu0 0.0
    %v523 = vand.u32 %v53, 4294901760
    %v524 = vsub.f32 %v53, %v523
    %525 = vmatpush1.msra.mxu0 %v524
    %v526 = vand.u32 %v21, 4294901760
    %v527 = vsub.f32 %v21, %v526
    %528 = vmatprep.mubr.f32.mxu0 %v527
    %v529 = vand.u32 %v20, 4294901760
    %v530 = vsub.f32 %v20, %v529
    %531 = vmatmul.mubr.f32.gmra.mrb[0].mxu0 %v530
    %v532 = vpop.f32.mrb[0].mxu0
    %v533 = vadd.f32 %v395, %v532
    %v534 = vpop.f32.mrb[0].mxu0
    %535 = vdwg.mxu0
    %536 = vmatprep.subr.mxu0 0.0
    %v537 = vand.u32 %v22, 4294901760
    %538 = vmatpush1.msra.mxu0 %v537
    %539 = vmatprep.subr.mxu0 0.0
    %v540 = vand.u32 %v23, 4294901760
    %541 = vmatpush1.msra.mxu0 %v540
    %542 = vmatprep.subr.mxu0 0.0
    %v543 = vand.u32 %v24, 4294901760
    %544 = vmatpush1.msra.mxu0 %v543
    %545 = vmatprep.subr.mxu0 0.0
    %v546 = vand.u32 %v25, 4294901760
    %547 = vmatpush1.msra.mxu0 %v546
    %548 = vmatprep.subr.mxu0 0.0
    %v549 = vand.u32 %v26, 4294901760
    %550 = vmatpush1.msra.mxu0 %v549
    %551 = vmatprep.subr.mxu0 0.0
    %v552 = vand.u32 %v27, 4294901760
    %553 = vmatpush1.msra.mxu0 %v552
    %554 = vmatprep.subr.mxu0 0.0
    %v555 = vand.u32 %v28, 4294901760
    %556 = vmatpush1.msra.mxu0 %v555
    %557 = vmatprep.subr.mxu0 0.0
    %v558 = vand.u32 %v29, 4294901760
    %559 = vmatpush1.msra.mxu0 %v558
    %560 = vmatprep.subr.mxu0 0.0
    %v561 = vand.u32 %v30, 4294901760
    %562 = vmatpush1.msra.mxu0 %v561
    %563 = vmatprep.subr.mxu0 0.0
    %v564 = vand.u32 %v31, 4294901760
    %565 = vmatpush1.msra.mxu0 %v564
    %566 = vmatprep.subr.mxu0 0.0
    %v567 = vand.u32 %v32, 4294901760
    %568 = vmatpush1.msra.mxu0 %v567
    %569 = vmatprep.subr.mxu0 0.0
    %v570 = vand.u32 %v33, 4294901760
    %571 = vmatpush1.msra.mxu0 %v570
    %572 = vmatprep.subr.mxu0 0.0
    %v573 = vand.u32 %v34, 4294901760
    %574 = vmatpush1.msra.mxu0 %v573
    %575 = vmatprep.subr.mxu0 0.0
    %v576 = vand.u32 %v35, 4294901760
    %577 = vmatpush1.msra.mxu0 %v576
    %578 = vmatprep.subr.mxu0 0.0
    %v579 = vand.u32 %v36, 4294901760
    %580 = vmatpush1.msra.mxu0 %v579
    %581 = vmatprep.subr.mxu0 0.0
    %v582 = vand.u32 %v37, 4294901760
    %583 = vmatpush1.msra.mxu0 %v582
    %584 = vmatprep.subr.mxu0 0.0
    %v585 = vand.u32 %v38, 4294901760
    %586 = vmatpush1.msra.mxu0 %v585
    %587 = vmatprep.subr.mxu0 0.0
    %v588 = vand.u32 %v39, 4294901760
    %589 = vmatpush1.msra.mxu0 %v588
    %590 = vmatprep.subr.mxu0 0.0
    %v591 = vand.u32 %v40, 4294901760
    %592 = vmatpush1.msra.mxu0 %v591
    %593 = vmatprep.subr.mxu0 0.0
    %v594 = vand.u32 %v41, 4294901760
    %595 = vmatpush1.msra.mxu0 %v594
    %596 = vmatprep.subr.mxu0 0.0
    %v597 = vand.u32 %v42, 4294901760
    %598 = vmatpush1.msra.mxu0 %v597
    %599 = vmatprep.subr.mxu0 0.0
    %v600 = vand.u32 %v43, 4294901760
    %601 = vmatpush1.msra.mxu0 %v600
    %602 = vmatprep.subr.mxu0 0.0
    %v603 = vand.u32 %v44, 4294901760
    %604 = vmatpush1.msra.mxu0 %v603
    %605 = vmatprep.subr.mxu0 0.0
    %v606 = vand.u32 %v45, 4294901760
    %607 = vmatpush1.msra.mxu0 %v606
    %608 = vmatprep.subr.mxu0 0.0
    %v609 = vand.u32 %v46, 4294901760
    %610 = vmatpush1.msra.mxu0 %v609
    %611 = vmatprep.subr.mxu0 0.0
    %v612 = vand.u32 %v47, 4294901760
    %613 = vmatpush1.msra.mxu0 %v612
    %614 = vmatprep.subr.mxu0 0.0
    %v615 = vand.u32 %v48, 4294901760
    %616 = vmatpush1.msra.mxu0 %v615
    %617 = vmatprep.subr.mxu0 0.0
    %v618 = vand.u32 %v49, 4294901760
    %619 = vmatpush1.msra.mxu0 %v618
    %620 = vmatprep.subr.mxu0 0.0
    %v621 = vand.u32 %v50, 4294901760
    %622 = vmatpush1.msra.mxu0 %v621
    %623 = vmatprep.subr.mxu0 0.0
    %v624 = vand.u32 %v51, 4294901760
    %625 = vmatpush1.msra.mxu0 %v624
    %626 = vmatprep.subr.mxu0 0.0
    %v627 = vand.u32 %v52, 4294901760
    %628 = vmatpush1.msra.mxu0 %v627
    %629 = vmatprep.subr.mxu0 0.0
    %v630 = vand.u32 %v53, 4294901760
    %631 = vmatpush1.msra.mxu0 %v630
    %v632 = vand.u32 %v21, 4294901760
    %v633 = vsub.f32 %v21, %v632
    %v634 = vand.u32 %v633, 4294901760
    %635 = vmatprep.mubr.f32.mxu0 %v634
    %v636 = vand.u32 %v20, 4294901760
    %v637 = vsub.f32 %v20, %v636
    %v638 = vand.u32 %v637, 4294901760
    %639 = vmatmul.mubr.f32.gmra.mrb[0].mxu0 %v638
    %v640 = vpop.f32.mrb[0].mxu0
    %v641 = vadd.f32 %v533, %v640
    %v642 = vpop.f32.mrb[0].mxu0
    %643 = vdwg.mxu0
    %644 = vmatprep.subr.mxu0 0.0
    %v645 = vand.u32 %v22, 4294901760
    %v646 = vsub.f32 %v22, %v645
    %v647 = vand.u32 %v646, 4294901760
    %648 = vmatpush1.msra.mxu0 %v647
    %649 = vmatprep.subr.mxu0 0.0
    %v650 = vand.u32 %v23, 4294901760
    %v651 = vsub.f32 %v23, %v650
    %v652 = vand.u32 %v651, 4294901760
    %653 = vmatpush1.msra.mxu0 %v652
    %654 = vmatprep.subr.mxu0 0.0
    %v655 = vand.u32 %v24, 4294901760
    %v656 = vsub.f32 %v24, %v655
    %v657 = vand.u32 %v656, 4294901760
    %658 = vmatpush1.msra.mxu0 %v657
    %659 = vmatprep.subr.mxu0 0.0
    %v660 = vand.u32 %v25, 4294901760
    %v661 = vsub.f32 %v25, %v660
    %v662 = vand.u32 %v661, 4294901760
    %663 = vmatpush1.msra.mxu0 %v662
    %664 = vmatprep.subr.mxu0 0.0
    %v665 = vand.u32 %v26, 4294901760
    %v666 = vsub.f32 %v26, %v665
    %v667 = vand.u32 %v666, 4294901760
    %668 = vmatpush1.msra.mxu0 %v667
    %669 = vmatprep.subr.mxu0 0.0
    %v670 = vand.u32 %v27, 4294901760
    %v671 = vsub.f32 %v27, %v670
    %v672 = vand.u32 %v671, 4294901760
    %673 = vmatpush1.msra.mxu0 %v672
    %674 = vmatprep.subr.mxu0 0.0
    %v675 = vand.u32 %v28, 4294901760
    %v676 = vsub.f32 %v28, %v675
    %v677 = vand.u32 %v676, 4294901760
    %678 = vmatpush1.msra.mxu0 %v677
    %679 = vmatprep.subr.mxu0 0.0
    %v680 = vand.u32 %v29, 4294901760
    %v681 = vsub.f32 %v29, %v680
    %v682 = vand.u32 %v681, 4294901760
    %683 = vmatpush1.msra.mxu0 %v682
    %684 = vmatprep.subr.mxu0 0.0
    %v685 = vand.u32 %v30, 4294901760
    %v686 = vsub.f32 %v30, %v685
    %v687 = vand.u32 %v686, 4294901760
    %688 = vmatpush1.msra.mxu0 %v687
    %689 = vmatprep.subr.mxu0 0.0
    %v690 = vand.u32 %v31, 4294901760
    %v691 = vsub.f32 %v31, %v690
    %v692 = vand.u32 %v691, 4294901760
    %693 = vmatpush1.msra.mxu0 %v692
    %694 = vmatprep.subr.mxu0 0.0
    %v695 = vand.u32 %v32, 4294901760
    %v696 = vsub.f32 %v32, %v695
    %v697 = vand.u32 %v696, 4294901760
    %698 = vmatpush1.msra.mxu0 %v697
    %699 = vmatprep.subr.mxu0 0.0
    %v700 = vand.u32 %v33, 4294901760
    %v701 = vsub.f32 %v33, %v700
    %v702 = vand.u32 %v701, 4294901760
    %703 = vmatpush1.msra.mxu0 %v702
    %704 = vmatprep.subr.mxu0 0.0
    %v705 = vand.u32 %v34, 4294901760
    %v706 = vsub.f32 %v34, %v705
    %v707 = vand.u32 %v706, 4294901760
    %708 = vmatpush1.msra.mxu0 %v707
    %709 = vmatprep.subr.mxu0 0.0
    %v710 = vand.u32 %v35, 4294901760
    %v711 = vsub.f32 %v35, %v710
    %v712 = vand.u32 %v711, 4294901760
    %713 = vmatpush1.msra.mxu0 %v712
    %714 = vmatprep.subr.mxu0 0.0
    %v715 = vand.u32 %v36, 4294901760
    %v716 = vsub.f32 %v36, %v715
    %v717 = vand.u32 %v716, 4294901760
    %718 = vmatpush1.msra.mxu0 %v717
    %719 = vmatprep.subr.mxu0 0.0
    %v720 = vand.u32 %v37, 4294901760
    %v721 = vsub.f32 %v37, %v720
    %v722 = vand.u32 %v721, 4294901760
    %723 = vmatpush1.msra.mxu0 %v722
    %724 = vmatprep.subr.mxu0 0.0
    %v725 = vand.u32 %v38, 4294901760
    %v726 = vsub.f32 %v38, %v725
    %v727 = vand.u32 %v726, 4294901760
    %728 = vmatpush1.msra.mxu0 %v727
    %729 = vmatprep.subr.mxu0 0.0
    %v730 = vand.u32 %v39, 4294901760
    %v731 = vsub.f32 %v39, %v730
    %v732 = vand.u32 %v731, 4294901760
    %733 = vmatpush1.msra.mxu0 %v732
    %734 = vmatprep.subr.mxu0 0.0
    %v735 = vand.u32 %v40, 4294901760
    %v736 = vsub.f32 %v40, %v735
    %v737 = vand.u32 %v736, 4294901760
    %738 = vmatpush1.msra.mxu0 %v737
    %739 = vmatprep.subr.mxu0 0.0
    %v740 = vand.u32 %v41, 4294901760
    %v741 = vsub.f32 %v41, %v740
    %v742 = vand.u32 %v741, 4294901760
    %743 = vmatpush1.msra.mxu0 %v742
    %744 = vmatprep.subr.mxu0 0.0
    %v745 = vand.u32 %v42, 4294901760
    %v746 = vsub.f32 %v42, %v745
    %v747 = vand.u32 %v746, 4294901760
    %748 = vmatpush1.msra.mxu0 %v747
    %749 = vmatprep.subr.mxu0 0.0
    %v750 = vand.u32 %v43, 4294901760
    %v751 = vsub.f32 %v43, %v750
    %v752 = vand.u32 %v751, 4294901760
    %753 = vmatpush1.msra.mxu0 %v752
    %754 = vmatprep.subr.mxu0 0.0
    %v755 = vand.u32 %v44, 4294901760
    %v756 = vsub.f32 %v44, %v755
    %v757 = vand.u32 %v756, 4294901760
    %758 = vmatpush1.msra.mxu0 %v757
    %759 = vmatprep.subr.mxu0 0.0
    %v760 = vand.u32 %v45, 4294901760
    %v761 = vsub.f32 %v45, %v760
    %v762 = vand.u32 %v761, 4294901760
    %763 = vmatpush1.msra.mxu0 %v762
    %764 = vmatprep.subr.mxu0 0.0
    %v765 = vand.u32 %v46, 4294901760
    %v766 = vsub.f32 %v46, %v765
    %v767 = vand.u32 %v766, 4294901760
    %768 = vmatpush1.msra.mxu0 %v767
    %769 = vmatprep.subr.mxu0 0.0
    %v770 = vand.u32 %v47, 4294901760
    %v771 = vsub.f32 %v47, %v770
    %v772 = vand.u32 %v771, 4294901760
    %773 = vmatpush1.msra.mxu0 %v772
    %774 = vmatprep.subr.mxu0 0.0
    %v775 = vand.u32 %v48, 4294901760
    %v776 = vsub.f32 %v48, %v775
    %v777 = vand.u32 %v776, 4294901760
    %778 = vmatpush1.msra.mxu0 %v777
    %779 = vmatprep.subr.mxu0 0.0
    %v780 = vand.u32 %v49, 4294901760
    %v781 = vsub.f32 %v49, %v780
    %v782 = vand.u32 %v781, 4294901760
    %783 = vmatpush1.msra.mxu0 %v782
    %784 = vmatprep.subr.mxu0 0.0
    %v785 = vand.u32 %v50, 4294901760
    %v786 = vsub.f32 %v50, %v785
    %v787 = vand.u32 %v786, 4294901760
    %788 = vmatpush1.msra.mxu0 %v787
    %789 = vmatprep.subr.mxu0 0.0
    %v790 = vand.u32 %v51, 4294901760
    %v791 = vsub.f32 %v51, %v790
    %v792 = vand.u32 %v791, 4294901760
    %793 = vmatpush1.msra.mxu0 %v792
    %794 = vmatprep.subr.mxu0 0.0
    %v795 = vand.u32 %v52, 4294901760
    %v796 = vsub.f32 %v52, %v795
    %v797 = vand.u32 %v796, 4294901760
    %798 = vmatpush1.msra.mxu0 %v797
    %799 = vmatprep.subr.mxu0 0.0
    %v800 = vand.u32 %v53, 4294901760
    %v801 = vsub.f32 %v53, %v800
    %v802 = vand.u32 %v801, 4294901760
    %803 = vmatpush1.msra.mxu0 %v802
    %v804 = vand.u32 %v21, 4294901760
    %805 = vmatprep.mubr.f32.mxu0 %v804
    %v806 = vand.u32 %v20, 4294901760
    %807 = vmatmul.mubr.f32.gmra.mrb[0].mxu0 %v806
    %v808 = vpop.f32.mrb[0].mxu0
    %v809 = vadd.f32 %v641, %v808
    %v810 = vpop.f32.mrb[0].mxu0
    %811 = vdwg.mxu0
    %812 = vmatprep.subr.mxu0 0.0
    %v813 = vand.u32 %v22, 4294901760
    %814 = vmatpush1.msra.mxu0 %v813
    %815 = vmatprep.subr.mxu0 0.0
    %v816 = vand.u32 %v23, 4294901760
    %817 = vmatpush1.msra.mxu0 %v816
    %818 = vmatprep.subr.mxu0 0.0
    %v819 = vand.u32 %v24, 4294901760
    %820 = vmatpush1.msra.mxu0 %v819
    %821 = vmatprep.subr.mxu0 0.0
    %v822 = vand.u32 %v25, 4294901760
    %823 = vmatpush1.msra.mxu0 %v822
    %824 = vmatprep.subr.mxu0 0.0
    %v825 = vand.u32 %v26, 4294901760
    %826 = vmatpush1.msra.mxu0 %v825
    %827 = vmatprep.subr.mxu0 0.0
    %v828 = vand.u32 %v27, 4294901760
    %829 = vmatpush1.msra.mxu0 %v828
    %830 = vmatprep.subr.mxu0 0.0
    %v831 = vand.u32 %v28, 4294901760
    %832 = vmatpush1.msra.mxu0 %v831
    %833 = vmatprep.subr.mxu0 0.0
    %v834 = vand.u32 %v29, 4294901760
    %835 = vmatpush1.msra.mxu0 %v834
    %836 = vmatprep.subr.mxu0 0.0
    %v837 = vand.u32 %v30, 4294901760
    %838 = vmatpush1.msra.mxu0 %v837
    %839 = vmatprep.subr.mxu0 0.0
    %v840 = vand.u32 %v31, 4294901760
    %841 = vmatpush1.msra.mxu0 %v840
    %842 = vmatprep.subr.mxu0 0.0
    %v843 = vand.u32 %v32, 4294901760
    %844 = vmatpush1.msra.mxu0 %v843
    %845 = vmatprep.subr.mxu0 0.0
    %v846 = vand.u32 %v33, 4294901760
    %847 = vmatpush1.msra.mxu0 %v846
    %848 = vmatprep.subr.mxu0 0.0
    %v849 = vand.u32 %v34, 4294901760
    %850 = vmatpush1.msra.mxu0 %v849
    %851 = vmatprep.subr.mxu0 0.0
    %v852 = vand.u32 %v35, 4294901760
    %853 = vmatpush1.msra.mxu0 %v852
    %854 = vmatprep.subr.mxu0 0.0
    %v855 = vand.u32 %v36, 4294901760
    %856 = vmatpush1.msra.mxu0 %v855
    %857 = vmatprep.subr.mxu0 0.0
    %v858 = vand.u32 %v37, 4294901760
    %859 = vmatpush1.msra.mxu0 %v858
    %860 = vmatprep.subr.mxu0 0.0
    %v861 = vand.u32 %v38, 4294901760
    %862 = vmatpush1.msra.mxu0 %v861
    %863 = vmatprep.subr.mxu0 0.0
    %v864 = vand.u32 %v39, 4294901760
    %865 = vmatpush1.msra.mxu0 %v864
    %866 = vmatprep.subr.mxu0 0.0
    %v867 = vand.u32 %v40, 4294901760
    %868 = vmatpush1.msra.mxu0 %v867
    %869 = vmatprep.subr.mxu0 0.0
    %v870 = vand.u32 %v41, 4294901760
    %871 = vmatpush1.msra.mxu0 %v870
    %872 = vmatprep.subr.mxu0 0.0
    %v873 = vand.u32 %v42, 4294901760
    %874 = vmatpush1.msra.mxu0 %v873
    %875 = vmatprep.subr.mxu0 0.0
    %v876 = vand.u32 %v43, 4294901760
    %877 = vmatpush1.msra.mxu0 %v876
    %878 = vmatprep.subr.mxu0 0.0
    %v879 = vand.u32 %v44, 4294901760
    %880 = vmatpush1.msra.mxu0 %v879
    %881 = vmatprep.subr.mxu0 0.0
    %v882 = vand.u32 %v45, 4294901760
    %883 = vmatpush1.msra.mxu0 %v882
    %884 = vmatprep.subr.mxu0 0.0
    %v885 = vand.u32 %v46, 4294901760
    %886 = vmatpush1.msra.mxu0 %v885
    %887 = vmatprep.subr.mxu0 0.0
    %v888 = vand.u32 %v47, 4294901760
    %889 = vmatpush1.msra.mxu0 %v888
    %890 = vmatprep.subr.mxu0 0.0
    %v891 = vand.u32 %v48, 4294901760
    %892 = vmatpush1.msra.mxu0 %v891
    %893 = vmatprep.subr.mxu0 0.0
    %v894 = vand.u32 %v49, 4294901760
    %895 = vmatpush1.msra.mxu0 %v894
    %896 = vmatprep.subr.mxu0 0.0
    %v897 = vand.u32 %v50, 4294901760
    %898 = vmatpush1.msra.mxu0 %v897
    %899 = vmatprep.subr.mxu0 0.0
    %v900 = vand.u32 %v51, 4294901760
    %901 = vmatpush1.msra.mxu0 %v900
    %902 = vmatprep.subr.mxu0 0.0
    %v903 = vand.u32 %v52, 4294901760
    %904 = vmatpush1.msra.mxu0 %v903
    %905 = vmatprep.subr.mxu0 0.0
    %v906 = vand.u32 %v53, 4294901760
    %907 = vmatpush1.msra.mxu0 %v906
    %v908 = vand.u32 %v21, 4294901760
    %909 = vmatprep.mubr.f32.mxu0 %v908
    %v910 = vand.u32 %v20, 4294901760
    %911 = vmatmul.mubr.f32.gmra.mrb[0].mxu0 %v910
    %v912 = vpop.f32.mrb[0].mxu0
    %v913 = vadd.f32 %v809, %v912
    %v914 = vpop.f32.mrb[0].mxu0
    %915 = vdwg.mxu0
    %v916 = vrsqrt.pop %v913
    %v917 = vmul.f32 %v913, %v916
    %vm918 = vcmp.eq.f32.partialorder %v913, inf
    %v919 = vsel %vm918, %v913, %v917
    %vm920 = vcmp.eq.f32.partialorder %v913, 0.0
    %v921 = vand.u32 %v913, 2147483648
    %v922 = vsel %vm920, %v921, %v919
    %v923 = vmul.f32 %v922, 0.25
    %v924 = vld [vmem:[%s1] sm:$0xff]
    %v925 = vadd.f32 %v923, 1e-08
    %927 = vset.pattern.permute.xlu0 0
    %928 = vperm.xlu0 %927, %v924
    %v929 = vpop.permute.xlu0 %928
    %v931 = vrcp.pop %v925
    %v932 = vmul.f32 %v929, %v931
    %v933 = vld [vmem:[%s3] sm:$0xff]
    %v934 = vld [vmem:[%s3 + $0x8] sm:$0xff]
    %v935 = vld [vmem:[%s3 + $0x10] sm:$0xff]
    %v936 = vld [vmem:[%s3 + $0x18] sm:$0xff]
    %vm937 = vcmask 130048
    %v939 = vsel %vm937, %v932, 0
    %v941 = vand.u32 %v934, 4294901760
    %942 = vmatprep.subr.mxu0 %v941
    %v943 = vand.u32 %v933, 4294901760
    %944 = vmatpush1.msra.mxu0 %v943
    %v945 = vand.u32 %v936, 4294901760
    %946 = vmatprep.subr.mxu0 %v945
    %v947 = vand.u32 %v935, 4294901760
    %948 = vmatpush1.msra.mxu0 %v947
    %949 = vmatprep.subr.mxu0 0.0
    %950 = vmatpush1.msra.mxu0 0.0
    %951 = vmatprep.subr.mxu0 0.0
    %952 = vmatpush1.msra.mxu0 0.0
    %953 = vmatprep.subr.mxu0 0.0
    %954 = vmatpush1.msra.mxu0 0.0
    %955 = vmatprep.subr.mxu0 0.0
    %956 = vmatpush1.msra.mxu0 0.0
    %957 = vmatprep.subr.mxu0 0.0
    %958 = vmatpush1.msra.mxu0 0.0
    %959 = vmatprep.subr.mxu0 0.0
    %960 = vmatpush1.msra.mxu0 0.0
    %961 = vmatprep.subr.mxu0 0.0
    %962 = vmatpush1.msra.mxu0 0.0
    %963 = vmatprep.subr.mxu0 0.0
    %964 = vmatpush1.msra.mxu0 0.0
    %965 = vmatprep.subr.mxu0 0.0
    %966 = vmatpush1.msra.mxu0 0.0
    %967 = vmatprep.subr.mxu0 0.0
    %968 = vmatpush1.msra.mxu0 0.0
    %969 = vmatprep.subr.mxu0 0.0
    %970 = vmatpush1.msra.mxu0 0.0
    %971 = vmatprep.subr.mxu0 0.0
    %972 = vmatpush1.msra.mxu0 0.0
    %973 = vmatprep.subr.mxu0 0.0
    %974 = vmatpush1.msra.mxu0 0.0
    %975 = vmatprep.subr.mxu0 0.0
    %976 = vmatpush1.msra.mxu0 0.0
    %977 = vmatprep.subr.mxu0 0.0
    %978 = vmatpush1.msra.mxu0 0.0
    %979 = vmatprep.subr.mxu0 0.0
    %980 = vmatpush1.msra.mxu0 0.0
    %981 = vmatprep.subr.mxu0 0.0
    %982 = vmatpush1.msra.mxu0 0.0
    %983 = vmatprep.subr.mxu0 0.0
    %984 = vmatpush1.msra.mxu0 0.0
    %985 = vmatprep.subr.mxu0 0.0
    %986 = vmatpush1.msra.mxu0 0.0
    %987 = vmatprep.subr.mxu0 0.0
    %988 = vmatpush1.msra.mxu0 0.0
    %989 = vmatprep.subr.mxu0 0.0
    %990 = vmatpush1.msra.mxu0 0.0
    %991 = vmatprep.subr.mxu0 0.0
    %992 = vmatpush1.msra.mxu0 0.0
    %993 = vmatprep.subr.mxu0 0.0
    %994 = vmatpush1.msra.mxu0 0.0
    %995 = vmatprep.subr.mxu0 0.0
    %996 = vmatpush1.msra.mxu0 0.0
    %997 = vmatprep.subr.mxu0 0.0
    %998 = vmatpush1.msra.mxu0 0.0
    %999 = vmatprep.subr.mxu0 0.0
    %1000 = vmatpush1.msra.mxu0 0.0
    %1001 = vmatprep.subr.mxu0 0.0
    %1002 = vmatpush1.msra.mxu0 0.0
    %1003 = vmatprep.subr.mxu0 0.0
    %1004 = vmatpush1.msra.mxu0 0.0
    %1005 = vmatprep.subr.mxu0 0.0
    %1006 = vmatpush1.msra.mxu0 0.0
    %1007 = vmatprep.subr.mxu0 0.0
    %1008 = vmatpush1.msra.mxu0 0.0
    %1009 = vmatprep.mubr.f32.mxu0 0.0
    %v1010 = vand.u32 %v939, 4294901760
    %v1011 = vsub.f32 %v939, %v1010
    %v1012 = vand.u32 %v1011, 4294901760
    %v1013 = vsub.f32 %v1011, %v1012
    %v1014 = vand.u32 %v1013, 4294901760
    %1015 = vmatmul.mubr.f32.gmra.mrb[0].mxu0 %v1014
    %v1016 = vpop.f32.mrb[0].mxu0
    %v1017 = vadd.f32 0.0, %v1016
    %v1018 = vpop.f32.mrb[0].mxu0
    %v1019 = vadd.f32 0.0, %v1018
    %1020 = vdwg.mxu0
    %v1021 = vand.u32 %v934, 4294901760
    %v1022 = vsub.f32 %v934, %v1021
    %v1023 = vand.u32 %v1022, 4294901760
    %v1024 = vsub.f32 %v1022, %v1023
    %v1025 = vand.u32 %v1024, 4294901760
    %1026 = vmatprep.subr.mxu0 %v1025
    %v1027 = vand.u32 %v933, 4294901760
    %v1028 = vsub.f32 %v933, %v1027
    %v1029 = vand.u32 %v1028, 4294901760
    %v1030 = vsub.f32 %v1028, %v1029
    %v1031 = vand.u32 %v1030, 4294901760
    %1032 = vmatpush1.msra.mxu0 %v1031
    %v1033 = vand.u32 %v936, 4294901760
    %v1034 = vsub.f32 %v936, %v1033
    %v1035 = vand.u32 %v1034, 4294901760
    %v1036 = vsub.f32 %v1034, %v1035
    %v1037 = vand.u32 %v1036, 4294901760
    %1038 = vmatprep.subr.mxu0 %v1037
    %v1039 = vand.u32 %v935, 4294901760
    %v1040 = vsub.f32 %v935, %v1039
    %v1041 = vand.u32 %v1040, 4294901760
    %v1042 = vsub.f32 %v1040, %v1041
    %v1043 = vand.u32 %v1042, 4294901760
    %1044 = vmatpush1.msra.mxu0 %v1043
    %1045 = vmatprep.subr.mxu0 0.0
    %1046 = vmatpush1.msra.mxu0 0.0
    %1047 = vmatprep.subr.mxu0 0.0
    %1048 = vmatpush1.msra.mxu0 0.0
    %1049 = vmatprep.subr.mxu0 0.0
    %1050 = vmatpush1.msra.mxu0 0.0
    %1051 = vmatprep.subr.mxu0 0.0
    %1052 = vmatpush1.msra.mxu0 0.0
    %1053 = vmatprep.subr.mxu0 0.0
    %1054 = vmatpush1.msra.mxu0 0.0
    %1055 = vmatprep.subr.mxu0 0.0
    %1056 = vmatpush1.msra.mxu0 0.0
    %1057 = vmatprep.subr.mxu0 0.0
    %1058 = vmatpush1.msra.mxu0 0.0
    %1059 = vmatprep.subr.mxu0 0.0
    %1060 = vmatpush1.msra.mxu0 0.0
    %1061 = vmatprep.subr.mxu0 0.0
    %1062 = vmatpush1.msra.mxu0 0.0
    %1063 = vmatprep.subr.mxu0 0.0
    %1064 = vmatpush1.msra.mxu0 0.0
    %1065 = vmatprep.subr.mxu0 0.0
    %1066 = vmatpush1.msra.mxu0 0.0
    %1067 = vmatprep.subr.mxu0 0.0
    %1068 = vmatpush1.msra.mxu0 0.0
    %1069 = vmatprep.subr.mxu0 0.0
    %1070 = vmatpush1.msra.mxu0 0.0
    %1071 = vmatprep.subr.mxu0 0.0
    %1072 = vmatpush1.msra.mxu0 0.0
    %1073 = vmatprep.subr.mxu0 0.0
    %1074 = vmatpush1.msra.mxu0 0.0
    %1075 = vmatprep.subr.mxu0 0.0
    %1076 = vmatpush1.msra.mxu0 0.0
    %1077 = vmatprep.subr.mxu0 0.0
    %1078 = vmatpush1.msra.mxu0 0.0
    %1079 = vmatprep.subr.mxu0 0.0
    %1080 = vmatpush1.msra.mxu0 0.0
    %1081 = vmatprep.subr.mxu0 0.0
    %1082 = vmatpush1.msra.mxu0 0.0
    %1083 = vmatprep.subr.mxu0 0.0
    %1084 = vmatpush1.msra.mxu0 0.0
    %1085 = vmatprep.subr.mxu0 0.0
    %1086 = vmatpush1.msra.mxu0 0.0
    %1087 = vmatprep.subr.mxu0 0.0
    %1088 = vmatpush1.msra.mxu0 0.0
    %1089 = vmatprep.subr.mxu0 0.0
    %1090 = vmatpush1.msra.mxu0 0.0
    %1091 = vmatprep.subr.mxu0 0.0
    %1092 = vmatpush1.msra.mxu0 0.0
    %1093 = vmatprep.subr.mxu0 0.0
    %1094 = vmatpush1.msra.mxu0 0.0
    %1095 = vmatprep.subr.mxu0 0.0
    %1096 = vmatpush1.msra.mxu0 0.0
    %1097 = vmatprep.subr.mxu0 0.0
    %1098 = vmatpush1.msra.mxu0 0.0
    %1099 = vmatprep.subr.mxu0 0.0
    %1100 = vmatpush1.msra.mxu0 0.0
    %1101 = vmatprep.subr.mxu0 0.0
    %1102 = vmatpush1.msra.mxu0 0.0
    %1103 = vmatprep.subr.mxu0 0.0
    %1104 = vmatpush1.msra.mxu0 0.0
    %1105 = vmatprep.mubr.f32.mxu0 0.0
    %v1106 = vand.u32 %v939, 4294901760
    %1107 = vmatmul.mubr.f32.gmra.mrb[0].mxu0 %v1106
    %v1108 = vpop.f32.mrb[0].mxu0
    %v1109 = vadd.f32 %v1017, %v1108
    %v1110 = vpop.f32.mrb[0].mxu0
    %v1111 = vadd.f32 %v1019, %v1110
    %1112 = vdwg.mxu0
    %v1113 = vand.u32 %v934, 4294901760
    %v1114 = vsub.f32 %v934, %v1113
    %1115 = vmatprep.subr.mxu0 %v1114
    %v1116 = vand.u32 %v933, 4294901760
    %v1117 = vsub.f32 %v933, %v1116
    %1118 = vmatpush1.msra.mxu0 %v1117
    %v1119 = vand.u32 %v936, 4294901760
    %v1120 = vsub.f32 %v936, %v1119
    %1121 = vmatprep.subr.mxu0 %v1120
    %v1122 = vand.u32 %v935, 4294901760
    %v1123 = vsub.f32 %v935, %v1122
    %1124 = vmatpush1.msra.mxu0 %v1123
    %1125 = vmatprep.subr.mxu0 0.0
    %1126 = vmatpush1.msra.mxu0 0.0
    %1127 = vmatprep.subr.mxu0 0.0
    %1128 = vmatpush1.msra.mxu0 0.0
    %1129 = vmatprep.subr.mxu0 0.0
    %1130 = vmatpush1.msra.mxu0 0.0
    %1131 = vmatprep.subr.mxu0 0.0
    %1132 = vmatpush1.msra.mxu0 0.0
    %1133 = vmatprep.subr.mxu0 0.0
    %1134 = vmatpush1.msra.mxu0 0.0
    %1135 = vmatprep.subr.mxu0 0.0
    %1136 = vmatpush1.msra.mxu0 0.0
    %1137 = vmatprep.subr.mxu0 0.0
    %1138 = vmatpush1.msra.mxu0 0.0
    %1139 = vmatprep.subr.mxu0 0.0
    %1140 = vmatpush1.msra.mxu0 0.0
    %1141 = vmatprep.subr.mxu0 0.0
    %1142 = vmatpush1.msra.mxu0 0.0
    %1143 = vmatprep.subr.mxu0 0.0
    %1144 = vmatpush1.msra.mxu0 0.0
    %1145 = vmatprep.subr.mxu0 0.0
    %1146 = vmatpush1.msra.mxu0 0.0
    %1147 = vmatprep.subr.mxu0 0.0
    %1148 = vmatpush1.msra.mxu0 0.0
    %1149 = vmatprep.subr.mxu0 0.0
    %1150 = vmatpush1.msra.mxu0 0.0
    %1151 = vmatprep.subr.mxu0 0.0
    %1152 = vmatpush1.msra.mxu0 0.0
    %1153 = vmatprep.subr.mxu0 0.0
    %1154 = vmatpush1.msra.mxu0 0.0
    %1155 = vmatprep.subr.mxu0 0.0
    %1156 = vmatpush1.msra.mxu0 0.0
    %1157 = vmatprep.subr.mxu0 0.0
    %1158 = vmatpush1.msra.mxu0 0.0
    %1159 = vmatprep.subr.mxu0 0.0
    %1160 = vmatpush1.msra.mxu0 0.0
    %1161 = vmatprep.subr.mxu0 0.0
    %1162 = vmatpush1.msra.mxu0 0.0
    %1163 = vmatprep.subr.mxu0 0.0
    %1164 = vmatpush1.msra.mxu0 0.0
    %1165 = vmatprep.subr.mxu0 0.0
    %1166 = vmatpush1.msra.mxu0 0.0
    %1167 = vmatprep.subr.mxu0 0.0
    %1168 = vmatpush1.msra.mxu0 0.0
    %1169 = vmatprep.subr.mxu0 0.0
    %1170 = vmatpush1.msra.mxu0 0.0
    %1171 = vmatprep.subr.mxu0 0.0
    %1172 = vmatpush1.msra.mxu0 0.0
    %1173 = vmatprep.subr.mxu0 0.0
    %1174 = vmatpush1.msra.mxu0 0.0
    %1175 = vmatprep.subr.mxu0 0.0
    %1176 = vmatpush1.msra.mxu0 0.0
    %1177 = vmatprep.subr.mxu0 0.0
    %1178 = vmatpush1.msra.mxu0 0.0
    %1179 = vmatprep.subr.mxu0 0.0
    %1180 = vmatpush1.msra.mxu0 0.0
    %1181 = vmatprep.subr.mxu0 0.0
    %1182 = vmatpush1.msra.mxu0 0.0
    %1183 = vmatprep.subr.mxu0 0.0
    %1184 = vmatpush1.msra.mxu0 0.0
    %1185 = vmatprep.mubr.f32.mxu0 0.0
    %v1186 = vand.u32 %v939, 4294901760
    %v1187 = vsub.f32 %v939, %v1186
    %1188 = vmatmul.mubr.f32.gmra.mrb[0].mxu0 %v1187
    %v1189 = vpop.f32.mrb[0].mxu0
    %v1190 = vadd.f32 %v1109, %v1189
    %v1191 = vpop.f32.mrb[0].mxu0
    %v1192 = vadd.f32 %v1111, %v1191
    %1193 = vdwg.mxu0
    %v1194 = vand.u32 %v934, 4294901760
    %1195 = vmatprep.subr.mxu0 %v1194
    %v1196 = vand.u32 %v933, 4294901760
    %1197 = vmatpush1.msra.mxu0 %v1196
    %v1198 = vand.u32 %v936, 4294901760
    %1199 = vmatprep.subr.mxu0 %v1198
    %v1200 = vand.u32 %v935, 4294901760
    %1201 = vmatpush1.msra.mxu0 %v1200
    %1202 = vmatprep.subr.mxu0 0.0
    %1203 = vmatpush1.msra.mxu0 0.0
    %1204 = vmatprep.subr.mxu0 0.0
    %1205 = vmatpush1.msra.mxu0 0.0
    %1206 = vmatprep.subr.mxu0 0.0
    %1207 = vmatpush1.msra.mxu0 0.0
    %1208 = vmatprep.subr.mxu0 0.0
    %1209 = vmatpush1.msra.mxu0 0.0
    %1210 = vmatprep.subr.mxu0 0.0
    %1211 = vmatpush1.msra.mxu0 0.0
    %1212 = vmatprep.subr.mxu0 0.0
    %1213 = vmatpush1.msra.mxu0 0.0
    %1214 = vmatprep.subr.mxu0 0.0
    %1215 = vmatpush1.msra.mxu0 0.0
    %1216 = vmatprep.subr.mxu0 0.0
    %1217 = vmatpush1.msra.mxu0 0.0
    %1218 = vmatprep.subr.mxu0 0.0
    %1219 = vmatpush1.msra.mxu0 0.0
    %1220 = vmatprep.subr.mxu0 0.0
    %1221 = vmatpush1.msra.mxu0 0.0
    %1222 = vmatprep.subr.mxu0 0.0
    %1223 = vmatpush1.msra.mxu0 0.0
    %1224 = vmatprep.subr.mxu0 0.0
    %1225 = vmatpush1.msra.mxu0 0.0
    %1226 = vmatprep.subr.mxu0 0.0
    %1227 = vmatpush1.msra.mxu0 0.0
    %1228 = vmatprep.subr.mxu0 0.0
    %1229 = vmatpush1.msra.mxu0 0.0
    %1230 = vmatprep.subr.mxu0 0.0
    %1231 = vmatpush1.msra.mxu0 0.0
    %1232 = vmatprep.subr.mxu0 0.0
    %1233 = vmatpush1.msra.mxu0 0.0
    %1234 = vmatprep.subr.mxu0 0.0
    %1235 = vmatpush1.msra.mxu0 0.0
    %1236 = vmatprep.subr.mxu0 0.0
    %1237 = vmatpush1.msra.mxu0 0.0
    %1238 = vmatprep.subr.mxu0 0.0
    %1239 = vmatpush1.msra.mxu0 0.0
    %1240 = vmatprep.subr.mxu0 0.0
    %1241 = vmatpush1.msra.mxu0 0.0
    %1242 = vmatprep.subr.mxu0 0.0
    %1243 = vmatpush1.msra.mxu0 0.0
    %1244 = vmatprep.subr.mxu0 0.0
    %1245 = vmatpush1.msra.mxu0 0.0
    %1246 = vmatprep.subr.mxu0 0.0
    %1247 = vmatpush1.msra.mxu0 0.0
    %1248 = vmatprep.subr.mxu0 0.0
    %1249 = vmatpush1.msra.mxu0 0.0
    %1250 = vmatprep.subr.mxu0 0.0
    %1251 = vmatpush1.msra.mxu0 0.0
    %1252 = vmatprep.subr.mxu0 0.0
    %1253 = vmatpush1.msra.mxu0 0.0
    %1254 = vmatprep.subr.mxu0 0.0
    %1255 = vmatpush1.msra.mxu0 0.0
    %1256 = vmatprep.subr.mxu0 0.0
    %1257 = vmatpush1.msra.mxu0 0.0
    %1258 = vmatprep.subr.mxu0 0.0
    %1259 = vmatpush1.msra.mxu0 0.0
    %1260 = vmatprep.subr.mxu0 0.0
    %1261 = vmatpush1.msra.mxu0 0.0
    %1262 = vmatprep.mubr.f32.mxu0 0.0
    %v1263 = vand.u32 %v939, 4294901760
    %v1264 = vsub.f32 %v939, %v1263
    %v1265 = vand.u32 %v1264, 4294901760
    %1266 = vmatmul.mubr.f32.gmra.mrb[0].mxu0 %v1265
    %v1267 = vpop.f32.mrb[0].mxu0
    %v1268 = vadd.f32 %v1190, %v1267
    %v1269 = vpop.f32.mrb[0].mxu0
    %v1270 = vadd.f32 %v1192, %v1269
    %1271 = vdwg.mxu0
    %v1272 = vand.u32 %v934, 4294901760
    %v1273 = vsub.f32 %v934, %v1272
    %v1274 = vand.u32 %v1273, 4294901760
    %1275 = vmatprep.subr.mxu0 %v1274
    %v1276 = vand.u32 %v933, 4294901760
    %v1277 = vsub.f32 %v933, %v1276
    %v1278 = vand.u32 %v1277, 4294901760
    %1279 = vmatpush1.msra.mxu0 %v1278
    %v1280 = vand.u32 %v936, 4294901760
    %v1281 = vsub.f32 %v936, %v1280
    %v1282 = vand.u32 %v1281, 4294901760
    %1283 = vmatprep.subr.mxu0 %v1282
    %v1284 = vand.u32 %v935, 4294901760
    %v1285 = vsub.f32 %v935, %v1284
    %v1286 = vand.u32 %v1285, 4294901760
    %1287 = vmatpush1.msra.mxu0 %v1286
    %1288 = vmatprep.subr.mxu0 0.0
    %1289 = vmatpush1.msra.mxu0 0.0
    %1290 = vmatprep.subr.mxu0 0.0
    %1291 = vmatpush1.msra.mxu0 0.0
    %1292 = vmatprep.subr.mxu0 0.0
    %1293 = vmatpush1.msra.mxu0 0.0
    %1294 = vmatprep.subr.mxu0 0.0
    %1295 = vmatpush1.msra.mxu0 0.0
    %1296 = vmatprep.subr.mxu0 0.0
    %1297 = vmatpush1.msra.mxu0 0.0
    %1298 = vmatprep.subr.mxu0 0.0
    %1299 = vmatpush1.msra.mxu0 0.0
    %1300 = vmatprep.subr.mxu0 0.0
    %1301 = vmatpush1.msra.mxu0 0.0
    %1302 = vmatprep.subr.mxu0 0.0
    %1303 = vmatpush1.msra.mxu0 0.0
    %1304 = vmatprep.subr.mxu0 0.0
    %1305 = vmatpush1.msra.mxu0 0.0
    %1306 = vmatprep.subr.mxu0 0.0
    %1307 = vmatpush1.msra.mxu0 0.0
    %1308 = vmatprep.subr.mxu0 0.0
    %1309 = vmatpush1.msra.mxu0 0.0
    %1310 = vmatprep.subr.mxu0 0.0
    %1311 = vmatpush1.msra.mxu0 0.0
    %1312 = vmatprep.subr.mxu0 0.0
    %1313 = vmatpush1.msra.mxu0 0.0
    %1314 = vmatprep.subr.mxu0 0.0
    %1315 = vmatpush1.msra.mxu0 0.0
    %1316 = vmatprep.subr.mxu0 0.0
    %1317 = vmatpush1.msra.mxu0 0.0
    %1318 = vmatprep.subr.mxu0 0.0
    %1319 = vmatpush1.msra.mxu0 0.0
    %1320 = vmatprep.subr.mxu0 0.0
    %1321 = vmatpush1.msra.mxu0 0.0
    %1322 = vmatprep.subr.mxu0 0.0
    %1323 = vmatpush1.msra.mxu0 0.0
    %1324 = vmatprep.subr.mxu0 0.0
    %1325 = vmatpush1.msra.mxu0 0.0
    %1326 = vmatprep.subr.mxu0 0.0
    %1327 = vmatpush1.msra.mxu0 0.0
    %1328 = vmatprep.subr.mxu0 0.0
    %1329 = vmatpush1.msra.mxu0 0.0
    %1330 = vmatprep.subr.mxu0 0.0
    %1331 = vmatpush1.msra.mxu0 0.0
    %1332 = vmatprep.subr.mxu0 0.0
    %1333 = vmatpush1.msra.mxu0 0.0
    %1334 = vmatprep.subr.mxu0 0.0
    %1335 = vmatpush1.msra.mxu0 0.0
    %1336 = vmatprep.subr.mxu0 0.0
    %1337 = vmatpush1.msra.mxu0 0.0
    %1338 = vmatprep.subr.mxu0 0.0
    %1339 = vmatpush1.msra.mxu0 0.0
    %1340 = vmatprep.subr.mxu0 0.0
    %1341 = vmatpush1.msra.mxu0 0.0
    %1342 = vmatprep.subr.mxu0 0.0
    %1343 = vmatpush1.msra.mxu0 0.0
    %1344 = vmatprep.subr.mxu0 0.0
    %1345 = vmatpush1.msra.mxu0 0.0
    %1346 = vmatprep.subr.mxu0 0.0
    %1347 = vmatpush1.msra.mxu0 0.0
    %1348 = vmatprep.mubr.f32.mxu0 0.0
    %v1349 = vand.u32 %v939, 4294901760
    %1350 = vmatmul.mubr.f32.gmra.mrb[0].mxu0 %v1349
    %v1351 = vpop.f32.mrb[0].mxu0
    %v1352 = vadd.f32 %v1268, %v1351
    %v1353 = vpop.f32.mrb[0].mxu0
    %v1354 = vadd.f32 %v1270, %v1353
    %1355 = vdwg.mxu0
    %v1356 = vand.u32 %v934, 4294901760
    %1357 = vmatprep.subr.mxu0 %v1356
    %v1358 = vand.u32 %v933, 4294901760
    %1359 = vmatpush1.msra.mxu0 %v1358
    %v1360 = vand.u32 %v936, 4294901760
    %1361 = vmatprep.subr.mxu0 %v1360
    %v1362 = vand.u32 %v935, 4294901760
    %1363 = vmatpush1.msra.mxu0 %v1362
    %1364 = vmatprep.subr.mxu0 0.0
    %1365 = vmatpush1.msra.mxu0 0.0
    %1366 = vmatprep.subr.mxu0 0.0
    %1367 = vmatpush1.msra.mxu0 0.0
    %1368 = vmatprep.subr.mxu0 0.0
    %1369 = vmatpush1.msra.mxu0 0.0
    %1370 = vmatprep.subr.mxu0 0.0
    %1371 = vmatpush1.msra.mxu0 0.0
    %1372 = vmatprep.subr.mxu0 0.0
    %1373 = vmatpush1.msra.mxu0 0.0
    %1374 = vmatprep.subr.mxu0 0.0
    %1375 = vmatpush1.msra.mxu0 0.0
    %1376 = vmatprep.subr.mxu0 0.0
    %1377 = vmatpush1.msra.mxu0 0.0
    %1378 = vmatprep.subr.mxu0 0.0
    %1379 = vmatpush1.msra.mxu0 0.0
    %1380 = vmatprep.subr.mxu0 0.0
    %1381 = vmatpush1.msra.mxu0 0.0
    %1382 = vmatprep.subr.mxu0 0.0
    %1383 = vmatpush1.msra.mxu0 0.0
    %1384 = vmatprep.subr.mxu0 0.0
    %1385 = vmatpush1.msra.mxu0 0.0
    %1386 = vmatprep.subr.mxu0 0.0
    %1387 = vmatpush1.msra.mxu0 0.0
    %1388 = vmatprep.subr.mxu0 0.0
    %1389 = vmatpush1.msra.mxu0 0.0
    %1390 = vmatprep.subr.mxu0 0.0
    %1391 = vmatpush1.msra.mxu0 0.0
    %1392 = vmatprep.subr.mxu0 0.0
    %1393 = vmatpush1.msra.mxu0 0.0
    %1394 = vmatprep.subr.mxu0 0.0
    %1395 = vmatpush1.msra.mxu0 0.0
    %1396 = vmatprep.subr.mxu0 0.0
    %1397 = vmatpush1.msra.mxu0 0.0
    %1398 = vmatprep.subr.mxu0 0.0
    %1399 = vmatpush1.msra.mxu0 0.0
    %1400 = vmatprep.subr.mxu0 0.0
    %1401 = vmatpush1.msra.mxu0 0.0
    %1402 = vmatprep.subr.mxu0 0.0
    %1403 = vmatpush1.msra.mxu0 0.0
    %1404 = vmatprep.subr.mxu0 0.0
    %1405 = vmatpush1.msra.mxu0 0.0
    %1406 = vmatprep.subr.mxu0 0.0
    %1407 = vmatpush1.msra.mxu0 0.0
    %1408 = vmatprep.subr.mxu0 0.0
    %1409 = vmatpush1.msra.mxu0 0.0
    %1410 = vmatprep.subr.mxu0 0.0
    %1411 = vmatpush1.msra.mxu0 0.0
    %1412 = vmatprep.subr.mxu0 0.0
    %1413 = vmatpush1.msra.mxu0 0.0
    %1414 = vmatprep.subr.mxu0 0.0
    %1415 = vmatpush1.msra.mxu0 0.0
    %1416 = vmatprep.subr.mxu0 0.0
    %1417 = vmatpush1.msra.mxu0 0.0
    %1418 = vmatprep.subr.mxu0 0.0
    %1419 = vmatpush1.msra.mxu0 0.0
    %1420 = vmatprep.subr.mxu0 0.0
    %1421 = vmatpush1.msra.mxu0 0.0
    %1422 = vmatprep.subr.mxu0 0.0
    %1423 = vmatpush1.msra.mxu0 0.0
    %1424 = vmatprep.mubr.f32.mxu0 0.0
    %v1425 = vand.u32 %v939, 4294901760
    %1426 = vmatmul.mubr.f32.gmra.mrb[0].mxu0 %v1425
    %v1427 = vpop.f32.mrb[0].mxu0
    %v1428 = vadd.f32 %v1352, %v1427
    %v1429 = vpop.f32.mrb[0].mxu0
    %v1430 = vadd.f32 %v1354, %v1429
    %1431 = vdwg.mxu0
    %v1432 = vmul.f32 %v18, %v1428
    %v1433 = vmul.f32 %v19, %v1430
    %1434 = vst [vmem:[#allocation2] sm:$0xff] %v1432
    %1435 = vst [vmem:[#allocation2 + $0x8] sm:$0xff] %v1433
    // Predicated region
    $region18: #{tpu_custom_call.1} parent=1 // pred_check
      _
    $region19: #{tpu_custom_call.1} parent=1 // pred_check_branch
      %1437 = sbr.rel (0) target = $region21
    $region20: #{tpu_custom_call.1} parent=1 // pred_region
      %s1439 = ssub.s32 256, 256
      %1440 = vsyncadd [#allocation3], %s1439
      %s1442 = sshll.u32 [#allocation2], 4
      %s1443 = int_to_ptr.vmem [resolvable:$true] %s1442
      %1445 = dma.vmem_to_hbm [thread:$0]  %s1443, 256, %s4, [#allocation3]
    $region21: #{tpu_custom_call.1} parent=1 // pred_fallthru
      _
    // Predicated region
    $region22: #{tpu_custom_call.1} parent=1 // pred_check
      _
    $region23: #{tpu_custom_call.1} parent=1 // pred_check_branch
      %1447 = sbr.rel (0) target = $region25
    $region24: #{tpu_custom_call.1} parent=1 // pred_region
      %1448 = dma.done [#allocation3], 256
    $region25: #{tpu_custom_call.1} parent=1 // pred_fallthru
      _
    %1449 = vsyncpa [#allocation3], 1

</llo_original>
